<compile_context>
chip_gen: v7x
topology: tpu7x:2x2x1
jax: 0.10.0
libtpu: 0.0.40
codegen_flags: <defaults>
</compile_context>

<pallas_src>
import jax
import jax.numpy as jnp
from jax.experimental import pallas as pl
from jax.experimental.pallas import tpu as pltpu

FC_OUT = 5     # fc output features
LANE = 128     # lane-dense padded output width


def emb_rnn_pool_fc_kernel(tok_ref, eproj_ref, whh_ref, fcw_ref, fcb_ref, o_ref):
    """Fused (projected) embedding gather + RNN recurrence + max-over-time + padded Linear.

    tok_ref   : (S*Bp, 1)  int32  time-major flattened token ids (batch padded to Bp)
    eproj_ref : (Vp, H)    bf16   emb @ W_ih^T + (b_ih + b_hh), vocab rows padded to Vp
    whh_ref   : (H, H)     bf16   W_hh^T
    fcw_ref   : (H, 128)   bf16   fc.weight^T zero-padded to 128 lanes
    fcb_ref   : (1, 128)   f32    fc.bias zero-padded to 128 lanes
    o_ref     : (Bp, 128)  f32    lane-dense logits slab (rows [:B], cols [:5] are real)
    """
    Bp = o_ref.shape[0]
    SB = tok_ref.shape[0]
    S = SB // Bp
    Vp, H = eproj_ref.shape

    # --- Gather expressed as one-hot @ E_proj (single bf16 MXU pass, exact rows). ---
    tok = tok_ref[...]                                              # (S*Bp, 1) int32
    vocab_ids = jax.lax.broadcasted_iota(jnp.int32, (SB, Vp), 1)    # (S*Bp, Vp)
    onehot = (tok == vocab_ids).astype(jnp.bfloat16)                # exact 0/1 rows
    x_proj = jnp.dot(onehot, eproj_ref[...],
                     preferred_element_type=jnp.float32)            # (S*Bp, H) f32
    x_proj = x_proj.reshape(S, Bp, H)                               # clean leading-axis index

    whh = whh_ref[...]                                              # (H, H) bf16

    # --- Serial recurrence: h0 == 0, so step 0 is just tanh(x_proj[0]). ---
    h = jnp.tanh(x_proj[0])                                         # (Bp, H) f32
    m = h                                                           # running max seeded from step 0
    for t in range(1, S):
        h = jnp.tanh(
            x_proj[t] + jnp.dot(h.astype(jnp.bfloat16), whh,
                                preferred_element_type=jnp.float32)
        )
        m = jnp.maximum(m, h)                                       # == MaxPool1d(sentence_length)

    # --- Lane-dense, sublane-aligned epilogue: (Bp, 128) unmasked store. ---
    o_ref[...] = (
        jnp.dot(m.astype(jnp.bfloat16), fcw_ref[...],
                preferred_element_type=jnp.float32)
        + fcb_ref[...]
    )


def torch_model_forward(x_tokens, params):
    """Forward pass (y is None branch): returns (B, 5) logits."""
    B, S = x_tokens.shape
    Vp, H = params["e_proj"].shape

    # Pad batch to a sublane multiple (extra rows are padding_idx tokens -> harmless),
    # then time-major flatten so each timestep is a contiguous row block in-kernel.
    Bp = max(8, ((B + 7) // 8) * 8)
    tok_pad = jnp.zeros((Bp, S), jnp.int32).at[:B].set(x_tokens.astype(jnp.int32))
    tok_flat = jnp.transpose(tok_pad).reshape(S * Bp, 1)

    flops = int(
        2 * (S * Bp) * Vp * H         # one-hot gather (produces x_proj directly)
        + 2 * (S - 1) * Bp * H * H    # recurrence h @ W_hh
        + 2 * Bp * H * LANE           # padded fc
    )
    bytes_accessed = int(
        tok_flat.size * 4
        + params["e_proj"].size * 2
        + params["w_hh_t"].size * 2
        + params["fc_w_pad_t"].size * 2 + params["fc_b_pad"].size * 4
        + Bp * LANE * 4
    )

    vmem_spec = pl.BlockSpec(memory_space=pltpu.MemorySpace.VMEM)
    out_pad = pl.pallas_call(
        emb_rnn_pool_fc_kernel,
        out_shape=jax.ShapeDtypeStruct((Bp, LANE), jnp.float32),
        in_specs=[vmem_spec] * 5,
        out_specs=vmem_spec,
        compiler_params=pltpu.CompilerParams(vmem_limit_bytes=32 * 1024 * 1024),
        cost_estimate=pl.CostEstimate(
            flops=flops,
            transcendentals=S * Bp * H,
            bytes_accessed=bytes_accessed,
        ),
    )(
        tok_flat,
        params["e_proj"],
        params["w_hh_t"],
        params["fc_w_pad_t"],
        params["fc_b_pad"],
    )
    return out_pad[:B, :FC_OUT]


def init_params(key, vocab_size, hidden_size):
    k = jax.random.split(key, 6)
    scale = 0.1
    v1 = vocab_size + 1
    vp = ((v1 + 7) // 8) * 8  # pad vocab rows to a sublane multiple

    emb = scale * jax.random.normal(k[0], (v1, hidden_size), jnp.float32)
    emb = emb.at[0].set(0.0)                        # padding_idx=0 -> zero embedding row
    emb_pad = jnp.zeros((vp, hidden_size), jnp.float32).at[:v1].set(emb)

    w_ih = scale * jax.random.normal(k[1], (hidden_size, hidden_size), jnp.float32)
    w_hh = scale * jax.random.normal(k[2], (hidden_size, hidden_size), jnp.float32)
    b_ih = scale * jax.random.normal(k[3], (hidden_size,), jnp.float32)
    b_hh = scale * jax.random.normal(k[4], (hidden_size,), jnp.float32)
    fc_w = scale * jax.random.normal(k[5], (FC_OUT, hidden_size), jnp.float32)
    fc_b = jnp.zeros((FC_OUT,), jnp.float32)

    # Fold the RNN input projection + biases into the embedding table offline.
    # Row 0 (padding_idx) correctly becomes the bias (do NOT zero it).
    e_proj = emb_pad @ w_ih.T + (b_ih + b_hh)[None, :]              # (Vp, H) f32

    fc_w_pad_t = jnp.zeros((hidden_size, LANE), jnp.float32).at[:, :FC_OUT].set(fc_w.T)
    fc_b_pad = jnp.zeros((1, LANE), jnp.float32).at[:, :FC_OUT].set(fc_b)

    return {
        "e_proj": e_proj.astype(jnp.bfloat16),            # (Vp, H) bf16 MXU operand
        "w_hh_t": w_hh.T.astype(jnp.bfloat16),            # (H, H)  bf16 MXU operand
        "fc_w_pad_t": fc_w_pad_t.astype(jnp.bfloat16),    # (H, 128) bf16, zero-padded
        "fc_b_pad": fc_b_pad,                             # (1, 128) f32, zero-padded
    }


def reference_forward(x_tokens, params):
    """Pure-JAX reference with the same (bf16-rounded) parameter values."""
    e_proj = params["e_proj"].astype(jnp.float32)          # (Vp, H)
    whh = params["w_hh_t"].astype(jnp.float32)             # (H, H)
    fcw = params["fc_w_pad_t"].astype(jnp.float32)[:, :FC_OUT]
    fcb = params["fc_b_pad"][:, :FC_OUT]

    x_proj = jnp.take(e_proj, x_tokens, axis=0)            # (B, S, H)
    B, S, H = x_proj.shape
    h = jnp.zeros((B, H), jnp.float32)
    hs = []
    for t in range(S):
        h = jnp.tanh(x_proj[:, t, :] + h @ whh)
        hs.append(h)
    m = jnp.max(jnp.stack(hs, axis=1), axis=1)              # max over time
    return m @ fcw + fcb


if __name__ == "__main__":
    # Small shapes consistent with the module.
    batch = 2
    sentence_length = 8
    vocab_size = 10   # len(vocab); embedding table has vocab_size + 1 rows
    hidden_size = 32

    key = jax.random.PRNGKey(0)
    k_tok, k_par = jax.random.split(key)

    params = init_params(k_par, vocab_size, hidden_size)
    x_tokens = jax.random.randint(
        k_tok, (batch, sentence_length), minval=0, maxval=vocab_size + 1, dtype=jnp.int32
    )

    y_pred = torch_model_forward(x_tokens, params)
    jax.block_until_ready(y_pred)
    assert y_pred.shape == (batch, FC_OUT)

    y_ref = reference_forward(x_tokens, params)
    assert jnp.allclose(y_pred, y_ref, atol=5e-2), "kernel vs reference mismatch"

    # TODO(synk): cross_entropy loss branch (y is not None) not implemented; forward returns logits.
    print("KERNEL_OK")
</pallas_src>

<mosaic_0001>
module attributes {stable_mosaic.version = 11 : i64} {
  func.func @emb_rnn_pool_fc_kernel(%arg0: memref<64x1xi32, #tpu.memory_space<vmem>>, %arg1: memref<16x32xbf16, #tpu.memory_space<vmem>>, %arg2: memref<32x32xbf16, #tpu.memory_space<vmem>>, %arg3: memref<32x128xbf16, #tpu.memory_space<vmem>>, %arg4: memref<1x128xf32, #tpu.memory_space<vmem>>, %arg5: memref<8x128xf32, #tpu.memory_space<vmem>>) attributes {dimension_semantics = [], scalar_prefetch = 0 : i64, scratch_operands = 0 : i64, tpu.core_type = #tpu.core_type<tc>} {
    %c0 = arith.constant 0 : index
    %c0_0 = arith.constant 0 : index
    %0 = vector.load %arg0[%c0, %c0_0] : memref<64x1xi32, #tpu.memory_space<vmem>>, vector<64x1xi32>
    %1 = tpu.iota {dimensions = array<i32: 1>} : vector<64x16xi32>
    %2 = vector.broadcast %0 : vector<64x1xi32> to vector<64x16xi32>
    %3 = arith.cmpi eq, %2, %1 : vector<64x16xi32>
    %4 = arith.extui %3 : vector<64x16xi1> to vector<64x16xi32>
    %5 = arith.sitofp %4 : vector<64x16xi32> to vector<64x16xf32>
    %6 = arith.truncf %5 : vector<64x16xf32> to vector<64x16xbf16>
    %c0_1 = arith.constant 0 : index
    %c0_2 = arith.constant 0 : index
    %7 = vector.load %arg1[%c0_1, %c0_2] : memref<16x32xbf16, #tpu.memory_space<vmem>>, vector<16x32xbf16>
    %cst = arith.constant dense<0.000000e+00> : vector<64x32xf32>
    %8 = tpu.matmul %6, %7, %cst {dimension_numbers = #tpu.dot_dimension_numbers<[1], [0], [0], [1], [0, 0, 1, 1], [], []>} : vector<64x16xbf16>, vector<16x32xbf16>, vector<64x32xf32> -> vector<64x32xf32>
    %9 = vector.shape_cast %8 : vector<64x32xf32> to vector<8x8x32xf32>
    %c0_3 = arith.constant 0 : index
    %c0_4 = arith.constant 0 : index
    %10 = vector.load %arg2[%c0_3, %c0_4] : memref<32x32xbf16, #tpu.memory_space<vmem>>, vector<32x32xbf16>
    %11 = vector.extract_strided_slice %9 {offsets = [0, 0, 0], sizes = [1, 8, 32], strides = [1, 1, 1]} : vector<8x8x32xf32> to vector<1x8x32xf32>
    %12 = vector.shape_cast %11 : vector<1x8x32xf32> to vector<8x32xf32>
    %13 = math.tanh %12 : vector<8x32xf32>
    %14 = vector.extract_strided_slice %9 {offsets = [1, 0, 0], sizes = [1, 8, 32], strides = [1, 1, 1]} : vector<8x8x32xf32> to vector<1x8x32xf32>
    %15 = vector.shape_cast %14 : vector<1x8x32xf32> to vector<8x32xf32>
    %16 = arith.truncf %13 : vector<8x32xf32> to vector<8x32xbf16>
    %cst_5 = arith.constant dense<0.000000e+00> : vector<8x32xf32>
    %17 = tpu.matmul %16, %10, %cst_5 {dimension_numbers = #tpu.dot_dimension_numbers<[1], [0], [0], [1], [0, 0, 1, 1], [], []>} : vector<8x32xbf16>, vector<32x32xbf16>, vector<8x32xf32> -> vector<8x32xf32>
    %18 = arith.addf %15, %17 : vector<8x32xf32>
    %19 = math.tanh %18 : vector<8x32xf32>
    %20 = arith.maximumf %13, %19 : vector<8x32xf32>
    %21 = vector.extract_strided_slice %9 {offsets = [2, 0, 0], sizes = [1, 8, 32], strides = [1, 1, 1]} : vector<8x8x32xf32> to vector<1x8x32xf32>
    %22 = vector.shape_cast %21 : vector<1x8x32xf32> to vector<8x32xf32>
    %23 = arith.truncf %19 : vector<8x32xf32> to vector<8x32xbf16>
    %cst_6 = arith.constant dense<0.000000e+00> : vector<8x32xf32>
    %24 = tpu.matmul %23, %10, %cst_6 {dimension_numbers = #tpu.dot_dimension_numbers<[1], [0], [0], [1], [0, 0, 1, 1], [], []>} : vector<8x32xbf16>, vector<32x32xbf16>, vector<8x32xf32> -> vector<8x32xf32>
    %25 = arith.addf %22, %24 : vector<8x32xf32>
    %26 = math.tanh %25 : vector<8x32xf32>
    %27 = arith.maximumf %20, %26 : vector<8x32xf32>
    %28 = vector.extract_strided_slice %9 {offsets = [3, 0, 0], sizes = [1, 8, 32], strides = [1, 1, 1]} : vector<8x8x32xf32> to vector<1x8x32xf32>
    %29 = vector.shape_cast %28 : vector<1x8x32xf32> to vector<8x32xf32>
    %30 = arith.truncf %26 : vector<8x32xf32> to vector<8x32xbf16>
    %cst_7 = arith.constant dense<0.000000e+00> : vector<8x32xf32>
    %31 = tpu.matmul %30, %10, %cst_7 {dimension_numbers = #tpu.dot_dimension_numbers<[1], [0], [0], [1], [0, 0, 1, 1], [], []>} : vector<8x32xbf16>, vector<32x32xbf16>, vector<8x32xf32> -> vector<8x32xf32>
    %32 = arith.addf %29, %31 : vector<8x32xf32>
    %33 = math.tanh %32 : vector<8x32xf32>
    %34 = arith.maximumf %27, %33 : vector<8x32xf32>
    %35 = vector.extract_strided_slice %9 {offsets = [4, 0, 0], sizes = [1, 8, 32], strides = [1, 1, 1]} : vector<8x8x32xf32> to vector<1x8x32xf32>
    %36 = vector.shape_cast %35 : vector<1x8x32xf32> to vector<8x32xf32>
    %37 = arith.truncf %33 : vector<8x32xf32> to vector<8x32xbf16>
    %cst_8 = arith.constant dense<0.000000e+00> : vector<8x32xf32>
    %38 = tpu.matmul %37, %10, %cst_8 {dimension_numbers = #tpu.dot_dimension_numbers<[1], [0], [0], [1], [0, 0, 1, 1], [], []>} : vector<8x32xbf16>, vector<32x32xbf16>, vector<8x32xf32> -> vector<8x32xf32>
    %39 = arith.addf %36, %38 : vector<8x32xf32>
    %40 = math.tanh %39 : vector<8x32xf32>
    %41 = arith.maximumf %34, %40 : vector<8x32xf32>
    %42 = vector.extract_strided_slice %9 {offsets = [5, 0, 0], sizes = [1, 8, 32], strides = [1, 1, 1]} : vector<8x8x32xf32> to vector<1x8x32xf32>
    %43 = vector.shape_cast %42 : vector<1x8x32xf32> to vector<8x32xf32>
    %44 = arith.truncf %40 : vector<8x32xf32> to vector<8x32xbf16>
    %cst_9 = arith.constant dense<0.000000e+00> : vector<8x32xf32>
    %45 = tpu.matmul %44, %10, %cst_9 {dimension_numbers = #tpu.dot_dimension_numbers<[1], [0], [0], [1], [0, 0, 1, 1], [], []>} : vector<8x32xbf16>, vector<32x32xbf16>, vector<8x32xf32> -> vector<8x32xf32>
    %46 = arith.addf %43, %45 : vector<8x32xf32>
    %47 = math.tanh %46 : vector<8x32xf32>
    %48 = arith.maximumf %41, %47 : vector<8x32xf32>
    %49 = vector.extract_strided_slice %9 {offsets = [6, 0, 0], sizes = [1, 8, 32], strides = [1, 1, 1]} : vector<8x8x32xf32> to vector<1x8x32xf32>
    %50 = vector.shape_cast %49 : vector<1x8x32xf32> to vector<8x32xf32>
    %51 = arith.truncf %47 : vector<8x32xf32> to vector<8x32xbf16>
    %cst_10 = arith.constant dense<0.000000e+00> : vector<8x32xf32>
    %52 = tpu.matmul %51, %10, %cst_10 {dimension_numbers = #tpu.dot_dimension_numbers<[1], [0], [0], [1], [0, 0, 1, 1], [], []>} : vector<8x32xbf16>, vector<32x32xbf16>, vector<8x32xf32> -> vector<8x32xf32>
    %53 = arith.addf %50, %52 : vector<8x32xf32>
    %54 = math.tanh %53 : vector<8x32xf32>
    %55 = arith.maximumf %48, %54 : vector<8x32xf32>
    %56 = vector.extract_strided_slice %9 {offsets = [7, 0, 0], sizes = [1, 8, 32], strides = [1, 1, 1]} : vector<8x8x32xf32> to vector<1x8x32xf32>
    %57 = vector.shape_cast %56 : vector<1x8x32xf32> to vector<8x32xf32>
    %58 = arith.truncf %54 : vector<8x32xf32> to vector<8x32xbf16>
    %cst_11 = arith.constant dense<0.000000e+00> : vector<8x32xf32>
    %59 = tpu.matmul %58, %10, %cst_11 {dimension_numbers = #tpu.dot_dimension_numbers<[1], [0], [0], [1], [0, 0, 1, 1], [], []>} : vector<8x32xbf16>, vector<32x32xbf16>, vector<8x32xf32> -> vector<8x32xf32>
    %60 = arith.addf %57, %59 : vector<8x32xf32>
    %61 = math.tanh %60 : vector<8x32xf32>
    %62 = arith.maximumf %55, %61 : vector<8x32xf32>
    %63 = arith.truncf %62 : vector<8x32xf32> to vector<8x32xbf16>
    %c0_12 = arith.constant 0 : index
    %c0_13 = arith.constant 0 : index
    %64 = vector.load %arg3[%c0_12, %c0_13] : memref<32x128xbf16, #tpu.memory_space<vmem>>, vector<32x128xbf16>
    %cst_14 = arith.constant dense<0.000000e+00> : vector<8x128xf32>
    %65 = tpu.matmul %63, %64, %cst_14 {dimension_numbers = #tpu.dot_dimension_numbers<[1], [0], [0], [1], [0, 0, 1, 1], [], []>} : vector<8x32xbf16>, vector<32x128xbf16>, vector<8x128xf32> -> vector<8x128xf32>
    %c0_15 = arith.constant 0 : index
    %c0_16 = arith.constant 0 : index
    %66 = vector.load %arg4[%c0_15, %c0_16] : memref<1x128xf32, #tpu.memory_space<vmem>>, vector<1x128xf32>
    %67 = vector.broadcast %66 : vector<1x128xf32> to vector<8x128xf32>
    %68 = arith.addf %65, %67 : vector<8x128xf32>
    %c0_17 = arith.constant 0 : index
    %c0_18 = arith.constant 0 : index
    %69 = vector.load %arg5[%c0_17, %c0_18] : memref<8x128xf32, #tpu.memory_space<vmem>>, vector<8x128xf32>
    tpu.vector_store %arg5[%c0_17, %c0_18], %68 {strides = array<i32>} : memref<8x128xf32, #tpu.memory_space<vmem>>, vector<8x128xf32>,
    return
  }
}

</mosaic_0001>

<llo_original>
// kernel: tpu_custom_call.1
$region0: #{tpu_custom_call.1}
  #allocation0 [shape = 'u32[]', space=smem, size = 0x4, offset = 0x4, fixed_abs, tag = 'smem constant byte address 0x4 - core index']
  #allocation1 [shape = 'u32[144,128]{1,0:T(1,128)}', space=vmem, size = 0x12000, scoped, tag = 'internal scratch']
  %s0 = inlined_call_operand.vmem [shape: s32[64,1], index: 0, kind: input, shape index: {}]
  %s1 = inlined_call_operand.vmem [shape: bf16[16,32], index: 1, kind: input, shape index: {}]
  %s2 = inlined_call_operand.vmem [shape: bf16[32,32], index: 2, kind: input, shape index: {}]
  %s3 = inlined_call_operand.vmem [shape: bf16[32,128], index: 3, kind: input, shape index: {}]
  %s4 = inlined_call_operand.vmem [shape: f32[1,128], index: 4, kind: input, shape index: {}]
  %s5 = inlined_call_operand.hbm [shape: f32[8,128], index: 5, kind: output, shape index: {}]
  %s6 = sld [smem:[#allocation0]]
  $region30: #{tpu_custom_call.1} parent=0
    _
  %s8 = ssub.s32 1, %s6
  %s9 = scalar_select 0, %s8, %s6
  $region1: #{tpu_custom_call.1} parent=0
    #allocation2 [shape = 'u8[4096]{0}', space=vmem, size = 0x1000, scoped, tag = 'output window, operand 0, single buffered']
    #allocation3 [shape = 's32[1]{0}', space=sflag, size = 0x4, scoped, tag = 'scoped memory for tpu_custom_call.1']
    %10 = vsyncpa [#allocation3], 0
    // Predicated region
    $region2: #{tpu_custom_call.1} parent=1 // pred_check
      _
    $region3: #{tpu_custom_call.1} parent=1 // pred_check_branch
      %12 = sbr.rel (0) target = $region5
    $region4: #{tpu_custom_call.1} parent=1 // pred_region
      _
    $region5: #{tpu_custom_call.1} parent=1 // pred_fallthru
      _
    // Predicated region
    $region6: #{tpu_custom_call.1} parent=1 // pred_check
      _
    $region7: #{tpu_custom_call.1} parent=1 // pred_check_branch
      %14 = sbr.rel (0) target = $region9
    $region8: #{tpu_custom_call.1} parent=1 // pred_region
      _
    $region9: #{tpu_custom_call.1} parent=1 // pred_fallthru
      _
    // Predicated region
    $region10: #{tpu_custom_call.1} parent=1 // pred_check
      _
    $region11: #{tpu_custom_call.1} parent=1 // pred_check_branch
      %16 = sbr.rel (0) target = $region13
    $region12: #{tpu_custom_call.1} parent=1 // pred_region
      _
    $region13: #{tpu_custom_call.1} parent=1 // pred_fallthru
      _
    // Predicated region
    $region14: #{tpu_custom_call.1} parent=1 // pred_check
      _
    $region15: #{tpu_custom_call.1} parent=1 // pred_check_branch
      %18 = sbr.rel (0) target = $region17
    $region16: #{tpu_custom_call.1} parent=1 // pred_region
      _
    $region17: #{tpu_custom_call.1} parent=1 // pred_fallthru
      _
    // Predicated region
    $region18: #{tpu_custom_call.1} parent=1 // pred_check
      _
    $region19: #{tpu_custom_call.1} parent=1 // pred_check_branch
      %20 = sbr.rel (0) target = $region21
    $region20: #{tpu_custom_call.1} parent=1 // pred_region
      _
    $region21: #{tpu_custom_call.1} parent=1 // pred_fallthru
      _
    %v22 = vld [vmem:[%s0] sm:$0xff]
    %v23 = vld [vmem:[%s0 + $0x8] sm:$0xff]
    %v24 = vld [vmem:[%s0 + $0x10] sm:$0xff]
    %v25 = vld [vmem:[%s0 + $0x18] sm:$0xff]
    %v26 = vld [vmem:[%s0 + $0x20] sm:$0xff]
    %v27 = vld [vmem:[%s0 + $0x28] sm:$0xff]
    %v28 = vld [vmem:[%s0 + $0x30] sm:$0xff]
    %v29 = vld [vmem:[%s0 + $0x38] sm:$0xff]
    %v30 = vlaneseq
    %v31 = vand.u32 %v30, 127
    %32 = vset.pattern.permute.xlu0 0
    %33 = vperm.xlu0 %32, %v22
    %v34 = vpop.permute.xlu0 %33
    %35 = vset.pattern.permute.xlu0 0
    %36 = vperm.xlu0 %35, %v23
    %v37 = vpop.permute.xlu0 %36
    %38 = vset.pattern.permute.xlu0 0
    %39 = vperm.xlu0 %38, %v24
    %v40 = vpop.permute.xlu0 %39
    %41 = vset.pattern.permute.xlu0 0
    %42 = vperm.xlu0 %41, %v25
    %v43 = vpop.permute.xlu0 %42
    %44 = vset.pattern.permute.xlu0 0
    %45 = vperm.xlu0 %44, %v26
    %v46 = vpop.permute.xlu0 %45
    %47 = vset.pattern.permute.xlu0 0
    %48 = vperm.xlu0 %47, %v27
    %v49 = vpop.permute.xlu0 %48
    %50 = vset.pattern.permute.xlu0 0
    %51 = vperm.xlu0 %50, %v28
    %v52 = vpop.permute.xlu0 %51
    %53 = vset.pattern.permute.xlu0 0
    %54 = vperm.xlu0 %53, %v29
    %v55 = vpop.permute.xlu0 %54
    %vm56 = vcmp.eq.s32.totalorder %v34, %v31
    %vm57 = vcmp.eq.s32.totalorder %v37, %v31
    %vm58 = vcmp.eq.s32.totalorder %v40, %v31
    %vm59 = vcmp.eq.s32.totalorder %v43, %v31
    %vm60 = vcmp.eq.s32.totalorder %v46, %v31
    %vm61 = vcmp.eq.s32.totalorder %v49, %v31
    %vm62 = vcmp.eq.s32.totalorder %v52, %v31
    %vm63 = vcmp.eq.s32.totalorder %v55, %v31
    %v64 = vsel %vm56, 1, 0
    %v65 = vsel %vm57, 1, 0
    %v66 = vsel %vm58, 1, 0
    %v67 = vsel %vm59, 1, 0
    %v68 = vsel %vm60, 1, 0
    %v69 = vsel %vm61, 1, 0
    %v70 = vsel %vm62, 1, 0
    %v71 = vsel %vm63, 1, 0
    %v72 = vcvt.s32.f32 %v64
    %v73 = vcvt.s32.f32 %v65
    %v74 = vcvt.s32.f32 %v66
    %v75 = vcvt.s32.f32 %v67
    %v76 = vcvt.s32.f32 %v68
    %v77 = vcvt.s32.f32 %v69
    %v78 = vcvt.s32.f32 %v70
    %v79 = vcvt.s32.f32 %v71
    %v80 = vpack.c.bf16 %v73, %v72
    %v81 = vpack.c.bf16 %v75, %v74
    %v82 = vpack.c.bf16 %v77, %v76
    %v83 = vpack.c.bf16 %v79, %v78
    %v84 = vld [vmem:[%s1] sm:$0xf]
    %v85 = vld [vmem:[%s1 + $0x4] sm:$0xf]
    %v88 = vunpack.c.l.b16 %v84
    %v89 = vunpack.c.l.b16 %v85
    %v90 = vpack.c.b16 %v89, %v88
    %vm92 = vcmask 130048
    %v94 = vsel %vm92, %v80, 0
    %v97 = vsel %vm92, %v81, 0
    %v100 = vsel %vm92, %v82, 0
    %v103 = vsel %vm92, %v83, 0
    %105 = vmatprep.subr.bf16.mxu0 0
    %106 = vmatpush1.bf16.msra.mxu0 %v90
    %107 = vmatprep.subr.bf16.mxu0 0
    %108 = vmatpush1.bf16.msra.mxu0 0
    %109 = vmatprep.subr.bf16.mxu0 0
    %110 = vmatpush1.bf16.msra.mxu0 0
    %111 = vmatprep.subr.bf16.mxu0 0
    %112 = vmatpush1.bf16.msra.mxu0 0
    %113 = vmatprep.subr.bf16.mxu0 0
    %114 = vmatpush1.bf16.msra.mxu0 0
    %115 = vmatprep.subr.bf16.mxu0 0
    %116 = vmatpush1.bf16.msra.mxu0 0
    %117 = vmatprep.subr.bf16.mxu0 0
    %118 = vmatpush1.bf16.msra.mxu0 0
    %119 = vmatprep.subr.bf16.mxu0 0
    %120 = vmatpush1.bf16.msra.mxu0 0
    %121 = vmatprep.subr.bf16.mxu0 0
    %122 = vmatpush1.bf16.msra.mxu0 0
    %123 = vmatprep.subr.bf16.mxu0 0
    %124 = vmatpush1.bf16.msra.mxu0 0
    %125 = vmatprep.subr.bf16.mxu0 0
    %126 = vmatpush1.bf16.msra.mxu0 0
    %127 = vmatprep.subr.bf16.mxu0 0
    %128 = vmatpush1.bf16.msra.mxu0 0
    %129 = vmatprep.subr.bf16.mxu0 0
    %130 = vmatpush1.bf16.msra.mxu0 0
    %131 = vmatprep.subr.bf16.mxu0 0
    %132 = vmatpush1.bf16.msra.mxu0 0
    %133 = vmatprep.subr.bf16.mxu0 0
    %134 = vmatpush1.bf16.msra.mxu0 0
    %135 = vmatprep.subr.bf16.mxu0 0
    %136 = vmatpush1.bf16.msra.mxu0 0
    %137 = vmatprep.mubr.bf16.mxu0 0
    %138 = vmatmul.mubr.bf16.gmra.mrb[0].mxu0 %v94
    %v139 = vpop.f32.mrb[0].mxu0
    %v140 = vadd.f32 0.0, %v139
    %v141 = vpop.f32.mrb[0].mxu0
    %v142 = vpop.f32.mrb[0].mxu0
    %v143 = vadd.f32 0.0, %v142
    %v144 = vpop.f32.mrb[0].mxu0
    %145 = vmatprep.mubr.bf16.mxu0 0
    %146 = vmatmul.mubr.bf16.gmra.mrb[0].mxu0 %v97
    %v147 = vpop.f32.mrb[0].mxu0
    %v148 = vadd.f32 0.0, %v147
    %v149 = vpop.f32.mrb[0].mxu0
    %v150 = vpop.f32.mrb[0].mxu0
    %v151 = vadd.f32 0.0, %v150
    %v152 = vpop.f32.mrb[0].mxu0
    %153 = vmatprep.mubr.bf16.mxu0 0
    %154 = vmatmul.mubr.bf16.gmra.mrb[0].mxu0 %v100
    %v155 = vpop.f32.mrb[0].mxu0
    %v156 = vadd.f32 0.0, %v155
    %v157 = vpop.f32.mrb[0].mxu0
    %v158 = vpop.f32.mrb[0].mxu0
    %v159 = vadd.f32 0.0, %v158
    %v160 = vpop.f32.mrb[0].mxu0
    %161 = vmatprep.mubr.bf16.mxu0 0
    %162 = vmatmul.mubr.bf16.gmra.mrb[0].mxu0 %v103
    %v163 = vpop.f32.mrb[0].mxu0
    %v164 = vadd.f32 0.0, %v163
    %v165 = vpop.f32.mrb[0].mxu0
    %v166 = vpop.f32.mrb[0].mxu0
    %v167 = vadd.f32 0.0, %v166
    %v168 = vpop.f32.mrb[0].mxu0
    %169 = vdwg.mxu0
    %v170 = vld [vmem:[%s2] sm:$0xf]
    %v171 = vld [vmem:[%s2 + $0x4] sm:$0xf]
    %v172 = vld [vmem:[%s2 + $0x8] sm:$0xf]
    %v173 = vld [vmem:[%s2 + $0xc] sm:$0xf]
    %v174 = vtanh.pop %v140
    %v175 = vpack.c.bf16 %v174, %v174
    %v180 = vunpack.c.l.b16 %v170
    %v181 = vunpack.c.l.b16 %v171
    %v182 = vunpack.c.l.b16 %v172
    %v183 = vunpack.c.l.b16 %v173
    %v184 = vpack.c.b16 %v181, %v180
    %v185 = vpack.c.b16 %v183, %v182
    %vm188 = vcmask 261120
    %v190 = vsel %vm188, %v175, 0
    %192 = vmatprep.subr.bf16.mxu0 0
    %193 = vmatpush1.bf16.msra.mxu0 %v184
    %194 = vmatprep.subr.bf16.mxu0 0
    %195 = vmatpush1.bf16.msra.mxu0 %v185
    %196 = vmatprep.subr.bf16.mxu0 0
    %197 = vmatpush1.bf16.msra.mxu0 0
    %198 = vmatprep.subr.bf16.mxu0 0
    %199 = vmatpush1.bf16.msra.mxu0 0
    %200 = vmatprep.subr.bf16.mxu0 0
    %201 = vmatpush1.bf16.msra.mxu0 0
    %202 = vmatprep.subr.bf16.mxu0 0
    %203 = vmatpush1.bf16.msra.mxu0 0
    %204 = vmatprep.subr.bf16.mxu0 0
    %205 = vmatpush1.bf16.msra.mxu0 0
    %206 = vmatprep.subr.bf16.mxu0 0
    %207 = vmatpush1.bf16.msra.mxu0 0
    %208 = vmatprep.subr.bf16.mxu0 0
    %209 = vmatpush1.bf16.msra.mxu0 0
    %210 = vmatprep.subr.bf16.mxu0 0
    %211 = vmatpush1.bf16.msra.mxu0 0
    %212 = vmatprep.subr.bf16.mxu0 0
    %213 = vmatpush1.bf16.msra.mxu0 0
    %214 = vmatprep.subr.bf16.mxu0 0
    %215 = vmatpush1.bf16.msra.mxu0 0
    %216 = vmatprep.subr.bf16.mxu0 0
    %217 = vmatpush1.bf16.msra.mxu0 0
    %218 = vmatprep.subr.bf16.mxu0 0
    %219 = vmatpush1.bf16.msra.mxu0 0
    %220 = vmatprep.subr.bf16.mxu0 0
    %221 = vmatpush1.bf16.msra.mxu0 0
    %222 = vmatprep.subr.bf16.mxu0 0
    %223 = vmatpush1.bf16.msra.mxu0 0
    %224 = vmatprep.mubr.bf16.mxu0 0
    %225 = vmatmul.mubr.bf16.gmra.mrb[0].mxu0 %v190
    %v226 = vpop.f32.mrb[0].mxu0
    %v227 = vadd.f32 0.0, %v226
    %v228 = vpop.f32.mrb[0].mxu0
    %v229 = vpop.f32.mrb[0].mxu0
    %v230 = vpop.f32.mrb[0].mxu0
    %231 = vdwg.mxu0
    %v232 = vadd.f32 %v143, %v227
    %v233 = vtanh.pop %v232
    %v234 = vmax.f32 %v174, %v233
    %v235 = vpack.c.bf16 %v233, %v233
    %v237 = vsel %vm188, %v235, 0
    %239 = vmatprep.subr.bf16.mxu0 0
    %240 = vmatpush1.bf16.msra.mxu0 %v184
    %241 = vmatprep.subr.bf16.mxu0 0
    %242 = vmatpush1.bf16.msra.mxu0 %v185
    %243 = vmatprep.subr.bf16.mxu0 0
    %244 = vmatpush1.bf16.msra.mxu0 0
    %245 = vmatprep.subr.bf16.mxu0 0
    %246 = vmatpush1.bf16.msra.mxu0 0
    %247 = vmatprep.subr.bf16.mxu0 0
    %248 = vmatpush1.bf16.msra.mxu0 0
    %249 = vmatprep.subr.bf16.mxu0 0
    %250 = vmatpush1.bf16.msra.mxu0 0
    %251 = vmatprep.subr.bf16.mxu0 0
    %252 = vmatpush1.bf16.msra.mxu0 0
    %253 = vmatprep.subr.bf16.mxu0 0
    %254 = vmatpush1.bf16.msra.mxu0 0
    %255 = vmatprep.subr.bf16.mxu0 0
    %256 = vmatpush1.bf16.msra.mxu0 0
    %257 = vmatprep.subr.bf16.mxu0 0
    %258 = vmatpush1.bf16.msra.mxu0 0
    %259 = vmatprep.subr.bf16.mxu0 0
    %260 = vmatpush1.bf16.msra.mxu0 0
    %261 = vmatprep.subr.bf16.mxu0 0
    %262 = vmatpush1.bf16.msra.mxu0 0
    %263 = vmatprep.subr.bf16.mxu0 0
    %264 = vmatpush1.bf16.msra.mxu0 0
    %265 = vmatprep.subr.bf16.mxu0 0
    %266 = vmatpush1.bf16.msra.mxu0 0
    %267 = vmatprep.subr.bf16.mxu0 0
    %268 = vmatpush1.bf16.msra.mxu0 0
    %269 = vmatprep.subr.bf16.mxu0 0
    %270 = vmatpush1.bf16.msra.mxu0 0
    %271 = vmatprep.mubr.bf16.mxu0 0
    %272 = vmatmul.mubr.bf16.gmra.mrb[0].mxu0 %v237
    %v273 = vpop.f32.mrb[0].mxu0
    %v274 = vadd.f32 0.0, %v273
    %v275 = vpop.f32.mrb[0].mxu0
    %v276 = vpop.f32.mrb[0].mxu0
    %v277 = vpop.f32.mrb[0].mxu0
    %278 = vdwg.mxu0
    %v279 = vadd.f32 %v148, %v274
    %v280 = vtanh.pop %v279
    %v281 = vmax.f32 %v234, %v280
    %v282 = vpack.c.bf16 %v280, %v280
    %v284 = vsel %vm188, %v282, 0
    %286 = vmatprep.subr.bf16.mxu0 0
    %287 = vmatpush1.bf16.msra.mxu0 %v184
    %288 = vmatprep.subr.bf16.mxu0 0
    %289 = vmatpush1.bf16.msra.mxu0 %v185
    %290 = vmatprep.subr.bf16.mxu0 0
    %291 = vmatpush1.bf16.msra.mxu0 0
    %292 = vmatprep.subr.bf16.mxu0 0
    %293 = vmatpush1.bf16.msra.mxu0 0
    %294 = vmatprep.subr.bf16.mxu0 0
    %295 = vmatpush1.bf16.msra.mxu0 0
    %296 = vmatprep.subr.bf16.mxu0 0
    %297 = vmatpush1.bf16.msra.mxu0 0
    %298 = vmatprep.subr.bf16.mxu0 0
    %299 = vmatpush1.bf16.msra.mxu0 0
    %300 = vmatprep.subr.bf16.mxu0 0
    %301 = vmatpush1.bf16.msra.mxu0 0
    %302 = vmatprep.subr.bf16.mxu0 0
    %303 = vmatpush1.bf16.msra.mxu0 0
    %304 = vmatprep.subr.bf16.mxu0 0
    %305 = vmatpush1.bf16.msra.mxu0 0
    %306 = vmatprep.subr.bf16.mxu0 0
    %307 = vmatpush1.bf16.msra.mxu0 0
    %308 = vmatprep.subr.bf16.mxu0 0
    %309 = vmatpush1.bf16.msra.mxu0 0
    %310 = vmatprep.subr.bf16.mxu0 0
    %311 = vmatpush1.bf16.msra.mxu0 0
    %312 = vmatprep.subr.bf16.mxu0 0
    %313 = vmatpush1.bf16.msra.mxu0 0
    %314 = vmatprep.subr.bf16.mxu0 0
    %315 = vmatpush1.bf16.msra.mxu0 0
    %316 = vmatprep.subr.bf16.mxu0 0
    %317 = vmatpush1.bf16.msra.mxu0 0
    %318 = vmatprep.mubr.bf16.mxu0 0
    %319 = vmatmul.mubr.bf16.gmra.mrb[0].mxu0 %v284
    %v320 = vpop.f32.mrb[0].mxu0
    %v321 = vadd.f32 0.0, %v320
    %v322 = vpop.f32.mrb[0].mxu0
    %v323 = vpop.f32.mrb[0].mxu0
    %v324 = vpop.f32.mrb[0].mxu0
    %325 = vdwg.mxu0
    %v326 = vadd.f32 %v151, %v321
    %v327 = vtanh.pop %v326
    %v328 = vmax.f32 %v281, %v327
    %v329 = vpack.c.bf16 %v327, %v327
    %v331 = vsel %vm188, %v329, 0
    %333 = vmatprep.subr.bf16.mxu0 0
    %334 = vmatpush1.bf16.msra.mxu0 %v184
    %335 = vmatprep.subr.bf16.mxu0 0
    %336 = vmatpush1.bf16.msra.mxu0 %v185
    %337 = vmatprep.subr.bf16.mxu0 0
    %338 = vmatpush1.bf16.msra.mxu0 0
    %339 = vmatprep.subr.bf16.mxu0 0
    %340 = vmatpush1.bf16.msra.mxu0 0
    %341 = vmatprep.subr.bf16.mxu0 0
    %342 = vmatpush1.bf16.msra.mxu0 0
    %343 = vmatprep.subr.bf16.mxu0 0
    %344 = vmatpush1.bf16.msra.mxu0 0
    %345 = vmatprep.subr.bf16.mxu0 0
    %346 = vmatpush1.bf16.msra.mxu0 0
    %347 = vmatprep.subr.bf16.mxu0 0
    %348 = vmatpush1.bf16.msra.mxu0 0
    %349 = vmatprep.subr.bf16.mxu0 0
    %350 = vmatpush1.bf16.msra.mxu0 0
    %351 = vmatprep.subr.bf16.mxu0 0
    %352 = vmatpush1.bf16.msra.mxu0 0
    %353 = vmatprep.subr.bf16.mxu0 0
    %354 = vmatpush1.bf16.msra.mxu0 0
    %355 = vmatprep.subr.bf16.mxu0 0
    %356 = vmatpush1.bf16.msra.mxu0 0
    %357 = vmatprep.subr.bf16.mxu0 0
    %358 = vmatpush1.bf16.msra.mxu0 0
    %359 = vmatprep.subr.bf16.mxu0 0
    %360 = vmatpush1.bf16.msra.mxu0 0
    %361 = vmatprep.subr.bf16.mxu0 0
    %362 = vmatpush1.bf16.msra.mxu0 0
    %363 = vmatprep.subr.bf16.mxu0 0
    %364 = vmatpush1.bf16.msra.mxu0 0
    %365 = vmatprep.mubr.bf16.mxu0 0
    %366 = vmatmul.mubr.bf16.gmra.mrb[0].mxu0 %v331
    %v367 = vpop.f32.mrb[0].mxu0
    %v368 = vadd.f32 0.0, %v367
    %v369 = vpop.f32.mrb[0].mxu0
    %v370 = vpop.f32.mrb[0].mxu0
    %v371 = vpop.f32.mrb[0].mxu0
    %372 = vdwg.mxu0
    %v373 = vadd.f32 %v156, %v368
    %v374 = vtanh.pop %v373
    %v375 = vmax.f32 %v328, %v374
    %v376 = vpack.c.bf16 %v374, %v374
    %v378 = vsel %vm188, %v376, 0
    %380 = vmatprep.subr.bf16.mxu0 0
    %381 = vmatpush1.bf16.msra.mxu0 %v184
    %382 = vmatprep.subr.bf16.mxu0 0
    %383 = vmatpush1.bf16.msra.mxu0 %v185
    %384 = vmatprep.subr.bf16.mxu0 0
    %385 = vmatpush1.bf16.msra.mxu0 0
    %386 = vmatprep.subr.bf16.mxu0 0
    %387 = vmatpush1.bf16.msra.mxu0 0
    %388 = vmatprep.subr.bf16.mxu0 0
    %389 = vmatpush1.bf16.msra.mxu0 0
    %390 = vmatprep.subr.bf16.mxu0 0
    %391 = vmatpush1.bf16.msra.mxu0 0
    %392 = vmatprep.subr.bf16.mxu0 0
    %393 = vmatpush1.bf16.msra.mxu0 0
    %394 = vmatprep.subr.bf16.mxu0 0
    %395 = vmatpush1.bf16.msra.mxu0 0
    %396 = vmatprep.subr.bf16.mxu0 0
    %397 = vmatpush1.bf16.msra.mxu0 0
    %398 = vmatprep.subr.bf16.mxu0 0
    %399 = vmatpush1.bf16.msra.mxu0 0
    %400 = vmatprep.subr.bf16.mxu0 0
    %401 = vmatpush1.bf16.msra.mxu0 0
    %402 = vmatprep.subr.bf16.mxu0 0
    %403 = vmatpush1.bf16.msra.mxu0 0
    %404 = vmatprep.subr.bf16.mxu0 0
    %405 = vmatpush1.bf16.msra.mxu0 0
    %406 = vmatprep.subr.bf16.mxu0 0
    %407 = vmatpush1.bf16.msra.mxu0 0
    %408 = vmatprep.subr.bf16.mxu0 0
    %409 = vmatpush1.bf16.msra.mxu0 0
    %410 = vmatprep.subr.bf16.mxu0 0
    %411 = vmatpush1.bf16.msra.mxu0 0
    %412 = vmatprep.mubr.bf16.mxu0 0
    %413 = vmatmul.mubr.bf16.gmra.mrb[0].mxu0 %v378
    %v414 = vpop.f32.mrb[0].mxu0
    %v415 = vadd.f32 0.0, %v414
    %v416 = vpop.f32.mrb[0].mxu0
    %v417 = vpop.f32.mrb[0].mxu0
    %v418 = vpop.f32.mrb[0].mxu0
    %419 = vdwg.mxu0
    %v420 = vadd.f32 %v159, %v415
    %v421 = vtanh.pop %v420
    %v422 = vmax.f32 %v375, %v421
    %v423 = vpack.c.bf16 %v421, %v421
    %v425 = vsel %vm188, %v423, 0
    %427 = vmatprep.subr.bf16.mxu0 0
    %428 = vmatpush1.bf16.msra.mxu0 %v184
    %429 = vmatprep.subr.bf16.mxu0 0
    %430 = vmatpush1.bf16.msra.mxu0 %v185
    %431 = vmatprep.subr.bf16.mxu0 0
    %432 = vmatpush1.bf16.msra.mxu0 0
    %433 = vmatprep.subr.bf16.mxu0 0
    %434 = vmatpush1.bf16.msra.mxu0 0
    %435 = vmatprep.subr.bf16.mxu0 0
    %436 = vmatpush1.bf16.msra.mxu0 0
    %437 = vmatprep.subr.bf16.mxu0 0
    %438 = vmatpush1.bf16.msra.mxu0 0
    %439 = vmatprep.subr.bf16.mxu0 0
    %440 = vmatpush1.bf16.msra.mxu0 0
    %441 = vmatprep.subr.bf16.mxu0 0
    %442 = vmatpush1.bf16.msra.mxu0 0
    %443 = vmatprep.subr.bf16.mxu0 0
    %444 = vmatpush1.bf16.msra.mxu0 0
    %445 = vmatprep.subr.bf16.mxu0 0
    %446 = vmatpush1.bf16.msra.mxu0 0
    %447 = vmatprep.subr.bf16.mxu0 0
    %448 = vmatpush1.bf16.msra.mxu0 0
    %449 = vmatprep.subr.bf16.mxu0 0
    %450 = vmatpush1.bf16.msra.mxu0 0
    %451 = vmatprep.subr.bf16.mxu0 0
    %452 = vmatpush1.bf16.msra.mxu0 0
    %453 = vmatprep.subr.bf16.mxu0 0
    %454 = vmatpush1.bf16.msra.mxu0 0
    %455 = vmatprep.subr.bf16.mxu0 0
    %456 = vmatpush1.bf16.msra.mxu0 0
    %457 = vmatprep.subr.bf16.mxu0 0
    %458 = vmatpush1.bf16.msra.mxu0 0
    %459 = vmatprep.mubr.bf16.mxu0 0
    %460 = vmatmul.mubr.bf16.gmra.mrb[0].mxu0 %v425
    %v461 = vpop.f32.mrb[0].mxu0
    %v462 = vadd.f32 0.0, %v461
    %v463 = vpop.f32.mrb[0].mxu0
    %v464 = vpop.f32.mrb[0].mxu0
    %v465 = vpop.f32.mrb[0].mxu0
    %466 = vdwg.mxu0
    %v467 = vadd.f32 %v164, %v462
    %v468 = vtanh.pop %v467
    %v469 = vmax.f32 %v422, %v468
    %v470 = vpack.c.bf16 %v468, %v468
    %v472 = vsel %vm188, %v470, 0
    %474 = vmatprep.subr.bf16.mxu0 0
    %475 = vmatpush1.bf16.msra.mxu0 %v184
    %476 = vmatprep.subr.bf16.mxu0 0
    %477 = vmatpush1.bf16.msra.mxu0 %v185
    %478 = vmatprep.subr.bf16.mxu0 0
    %479 = vmatpush1.bf16.msra.mxu0 0
    %480 = vmatprep.subr.bf16.mxu0 0
    %481 = vmatpush1.bf16.msra.mxu0 0
    %482 = vmatprep.subr.bf16.mxu0 0
    %483 = vmatpush1.bf16.msra.mxu0 0
    %484 = vmatprep.subr.bf16.mxu0 0
    %485 = vmatpush1.bf16.msra.mxu0 0
    %486 = vmatprep.subr.bf16.mxu0 0
    %487 = vmatpush1.bf16.msra.mxu0 0
    %488 = vmatprep.subr.bf16.mxu0 0
    %489 = vmatpush1.bf16.msra.mxu0 0
    %490 = vmatprep.subr.bf16.mxu0 0
    %491 = vmatpush1.bf16.msra.mxu0 0
    %492 = vmatprep.subr.bf16.mxu0 0
    %493 = vmatpush1.bf16.msra.mxu0 0
    %494 = vmatprep.subr.bf16.mxu0 0
    %495 = vmatpush1.bf16.msra.mxu0 0
    %496 = vmatprep.subr.bf16.mxu0 0
    %497 = vmatpush1.bf16.msra.mxu0 0
    %498 = vmatprep.subr.bf16.mxu0 0
    %499 = vmatpush1.bf16.msra.mxu0 0
    %500 = vmatprep.subr.bf16.mxu0 0
    %501 = vmatpush1.bf16.msra.mxu0 0
    %502 = vmatprep.subr.bf16.mxu0 0
    %503 = vmatpush1.bf16.msra.mxu0 0
    %504 = vmatprep.subr.bf16.mxu0 0
    %505 = vmatpush1.bf16.msra.mxu0 0
    %506 = vmatprep.mubr.bf16.mxu0 0
    %507 = vmatmul.mubr.bf16.gmra.mrb[0].mxu0 %v472
    %v508 = vpop.f32.mrb[0].mxu0
    %v509 = vadd.f32 0.0, %v508
    %v510 = vpop.f32.mrb[0].mxu0
    %v511 = vpop.f32.mrb[0].mxu0
    %v512 = vpop.f32.mrb[0].mxu0
    %513 = vdwg.mxu0
    %v514 = vadd.f32 %v167, %v509
    %v515 = vtanh.pop %v514
    %v516 = vmax.f32 %v469, %v515
    %v517 = vpack.c.bf16 %v516, %v516
    %v518 = vld [vmem:[%s3] sm:$0xf]
    %v519 = vld [vmem:[%s3 + $0x4] sm:$0xf]
    %v520 = vld [vmem:[%s3 + $0x8] sm:$0xf]
    %v521 = vld [vmem:[%s3 + $0xc] sm:$0xf]
    %v522 = vld [vmem:[%s4] sm:$0x1]
    %v524 = vlaneseq
    %v525 = vshrl.u32 %v524, 7
    %v526 = vsub.s32 0, %v525
    %v527 = vrot.slane %v522, %v526
    %v533 = vunpack.c.l.b16 %v518
    %v534 = vunpack.c.l.b16 %v519
    %v535 = vunpack.c.l.b16 %v520
    %v536 = vunpack.c.l.b16 %v521
    %v537 = vpack.c.b16 %v534, %v533
    %v538 = vpack.c.b16 %v536, %v535
    %v542 = vsel %vm188, %v517, 0
    %544 = vmatprep.subr.bf16.mxu0 0
    %545 = vmatpush1.bf16.msra.mxu0 %v537
    %546 = vmatprep.subr.bf16.mxu0 0
    %547 = vmatpush1.bf16.msra.mxu0 %v538
    %548 = vmatprep.subr.bf16.mxu0 0
    %549 = vmatpush1.bf16.msra.mxu0 0
    %550 = vmatprep.subr.bf16.mxu0 0
    %551 = vmatpush1.bf16.msra.mxu0 0
    %552 = vmatprep.subr.bf16.mxu0 0
    %553 = vmatpush1.bf16.msra.mxu0 0
    %554 = vmatprep.subr.bf16.mxu0 0
    %555 = vmatpush1.bf16.msra.mxu0 0
    %556 = vmatprep.subr.bf16.mxu0 0
    %557 = vmatpush1.bf16.msra.mxu0 0
    %558 = vmatprep.subr.bf16.mxu0 0
    %559 = vmatpush1.bf16.msra.mxu0 0
    %560 = vmatprep.subr.bf16.mxu0 0
    %561 = vmatpush1.bf16.msra.mxu0 0
    %562 = vmatprep.subr.bf16.mxu0 0
    %563 = vmatpush1.bf16.msra.mxu0 0
    %564 = vmatprep.subr.bf16.mxu0 0
    %565 = vmatpush1.bf16.msra.mxu0 0
    %566 = vmatprep.subr.bf16.mxu0 0
    %567 = vmatpush1.bf16.msra.mxu0 0
    %568 = vmatprep.subr.bf16.mxu0 0
    %569 = vmatpush1.bf16.msra.mxu0 0
    %570 = vmatprep.subr.bf16.mxu0 0
    %571 = vmatpush1.bf16.msra.mxu0 0
    %572 = vmatprep.subr.bf16.mxu0 0
    %573 = vmatpush1.bf16.msra.mxu0 0
    %574 = vmatprep.subr.bf16.mxu0 0
    %575 = vmatpush1.bf16.msra.mxu0 0
    %576 = vmatprep.mubr.bf16.mxu0 0
    %577 = vmatmul.mubr.bf16.gmra.mrb[0].mxu0 %v542
    %v578 = vpop.f32.mrb[0].mxu0
    %v579 = vadd.f32 %v527, %v578
    %v580 = vpop.f32.mrb[0].mxu0
    %v581 = vpop.f32.mrb[0].mxu0
    %v582 = vpop.f32.mrb[0].mxu0
    %583 = vdwg.mxu0
    %584 = vst [vmem:[#allocation2] sm:$0xff] %v579
    // Predicated region
    $region22: #{tpu_custom_call.1} parent=1 // pred_check
      _
    $region23: #{tpu_custom_call.1} parent=1 // pred_check_branch
      %586 = sbr.rel (0) target = $region25
    $region24: #{tpu_custom_call.1} parent=1 // pred_region
      %s588 = ssub.s32 128, 128
      %589 = vsyncadd [#allocation3], %s588
      %s591 = sshll.u32 [#allocation2], 4
      %s592 = int_to_ptr.vmem [resolvable:$true] %s591
      %594 = dma.vmem_to_hbm [thread:$0]  %s592, 128, %s5, [#allocation3]
    $region25: #{tpu_custom_call.1} parent=1 // pred_fallthru
      _
    // Predicated region
    $region26: #{tpu_custom_call.1} parent=1 // pred_check
      _
    $region27: #{tpu_custom_call.1} parent=1 // pred_check_branch
      %596 = sbr.rel (0) target = $region29
    $region28: #{tpu_custom_call.1} parent=1 // pred_region
      %597 = dma.done [#allocation3], 128
    $region29: #{tpu_custom_call.1} parent=1 // pred_fallthru
      _
    %598 = vsyncpa [#allocation3], 1

</llo_original>
